<compile_context>
chip_gen: v7x
topology: tpu7x:2x2x1
jax: 0.10.0
libtpu: 0.0.40
codegen_flags: <defaults>
</compile_context>

<pallas_src>
import jax
import jax.numpy as jnp
from jax.experimental import pallas as pl
from jax.experimental.pallas import tpu as pltpu  # noqa: F401  (TPU backend)

_LANES = 128  # TPU vreg lane width


def _copy_kernel(x_ref, o_ref):
    # Identity copy of the whole (lane-dense) tile.
    o_ref[...] = x_ref[...]


def view_as_pallas(x117, x110, x112, x113):
    """Reproduce torch's x117.view(x110, -1, x112, x113)."""
    total = x117.size
    denom = x110 * x112 * x113
    assert total % denom == 0, "view shape does not divide element count"
    merged_c = total // denom  # -1 dim of the view

    # Lane-dense 2D slab: last dim a multiple of 128 -> unmasked vst.
    assert total % _LANES == 0, "element count not a multiple of 128 lanes"
    rows = total // _LANES
    x2d = x117.reshape(rows, _LANES)

    out2d = pl.pallas_call(
        _copy_kernel,
        out_shape=jax.ShapeDtypeStruct((rows, _LANES), x117.dtype),
        in_specs=[pl.BlockSpec((rows, _LANES), lambda: (0, 0))],
        out_specs=pl.BlockSpec((rows, _LANES), lambda: (0, 0)),
        input_output_aliases={0: 0},  # output reuses the input buffer
    )(x2d)

    return out2d.reshape(x110, merged_c, x112, x113)


if __name__ == "__main__":
    key = jax.random.PRNGKey(0)
    # Shapes exactly as the PyTorch module implies.
    x117 = jax.random.normal(key, (1, 176, 2, 14, 14), dtype=jnp.float32)
    x110, x112, x113 = 1, 14, 14

    # Reference (pure metadata reshape) computed before the kernel call, since
    # the kernel's input buffer is donated via input_output_aliases.
    ref = x117.reshape(x110, -1, x112, x113)

    out = view_as_pallas(x117, x110, x112, x113)
    out = jax.block_until_ready(out)

    assert out.shape == (1, 352, 14, 14), out.shape
    assert jnp.array_equal(out, ref), "mismatch vs reference reshape"

    print("KERNEL_OK")
</pallas_src>

<mosaic_0001>
module attributes {stable_mosaic.version = 11 : i64} {
  func.func @_copy_kernel(%arg0: memref<539x128xf32, #tpu.memory_space<vmem>>, %arg1: memref<539x128xf32, #tpu.memory_space<vmem>>) attributes {dimension_semantics = [], scalar_prefetch = 0 : i64, scratch_operands = 0 : i64, tpu.core_type = #tpu.core_type<tc>} {
    %c0 = arith.constant 0 : index
    %c0_0 = arith.constant 0 : index
    %0 = vector.load %arg0[%c0, %c0_0] : memref<539x128xf32, #tpu.memory_space<vmem>>, vector<539x128xf32>
    %c0_1 = arith.constant 0 : index
    %c0_2 = arith.constant 0 : index
    %1 = vector.load %arg1[%c0_1, %c0_2] : memref<539x128xf32, #tpu.memory_space<vmem>>, vector<539x128xf32>
    tpu.vector_store %arg1[%c0_1, %c0_2], %0 {strides = array<i32>} : memref<539x128xf32, #tpu.memory_space<vmem>>, vector<539x128xf32>,
    return
  }
}

</mosaic_0001>

<llo_original>
// kernel: tpu_custom_call.1
$region0: #{tpu_custom_call.1}
  #allocation0 [shape = 'u32[]', space=smem, size = 0x4, offset = 0x4, fixed_abs, tag = 'smem constant byte address 0x4 - core index']
  #allocation1 [shape = 'u32[144,128]{1,0:T(1,128)}', space=vmem, size = 0x12000, scoped, tag = 'internal scratch']
  %s0 = inlined_call_operand.hbm [shape: f32[539,128], index: 0, kind: input, shape index: {}, may-alias: {0,1}]
  %s1 = inlined_call_operand.hbm [shape: f32[539,128], index: 1, kind: output, shape index: {}, may-alias: {0,1}]
  %s2 = sld [smem:[#allocation0]]
  $region18: #{tpu_custom_call.1} parent=0
    _
  %s4 = ssub.s32 1, %s2
  %s5 = scalar_select 0, %s4, %s2
  $region1: #{tpu_custom_call.1} parent=0
    #allocation2 [shape = 'u8[278528]{0}', space=vmem, size = 0x44000, scoped, tag = 'input window, operand 0, single buffered']
    #allocation3 [shape = 's32[1]{0}', space=sflag, size = 0x4, scoped, tag = 'scoped memory for tpu_custom_call.1']
    #allocation4 [shape = 's32[1]{0}', space=sflag, size = 0x4, scoped, tag = 'scoped memory for tpu_custom_call.1']
    #allocation5 [shape = 'u8[278528]{0}', space=vmem, size = 0x44000, scoped, tag = 'output window, operand 0, single buffered']
    %6 = vsyncpa [#allocation3], 0
    %7 = vsyncpa [#allocation4], 0
    // Predicated region
    $region2: #{tpu_custom_call.1} parent=1 // pred_check
      _
    $region3: #{tpu_custom_call.1} parent=1 // pred_check_branch
      %9 = sbr.rel (0) target = $region5
    $region4: #{tpu_custom_call.1} parent=1 // pred_region
      %s11 = ssub.s32 8704, 8704
      %12 = vsyncadd [#allocation3], %s11
      %s13 = sshll.u32 [#allocation2], 4
      %s14 = int_to_ptr.vmem [resolvable:$true] %s13
      %19 = dma.hbm_to_vmem [thread:$0]  %s0, 8704, %s14, [#allocation3], 128, 128, 8
    $region5: #{tpu_custom_call.1} parent=1 // pred_fallthru
      _
    // Predicated region
    $region6: #{tpu_custom_call.1} parent=1 // pred_check
      _
    $region7: #{tpu_custom_call.1} parent=1 // pred_check_branch
      %21 = sbr.rel (0) target = $region9
    $region8: #{tpu_custom_call.1} parent=1 // pred_region
      %22 = dma.done [#allocation3], 8704
    $region9: #{tpu_custom_call.1} parent=1 // pred_fallthru
      _
    %v23 = vld [vmem:[#allocation2] sm:$0xff]
    %v24 = vld [vmem:[#allocation2 + $0x8] sm:$0xff]
    %v25 = vld [vmem:[#allocation2 + $0x10] sm:$0xff]
    %v26 = vld [vmem:[#allocation2 + $0x18] sm:$0xff]
    %v27 = vld [vmem:[#allocation2 + $0x20] sm:$0xff]
    %v28 = vld [vmem:[#allocation2 + $0x28] sm:$0xff]
    %v29 = vld [vmem:[#allocation2 + $0x30] sm:$0xff]
    %v30 = vld [vmem:[#allocation2 + $0x38] sm:$0xff]
    %v31 = vld [vmem:[#allocation2 + $0x40] sm:$0xff]
    %v32 = vld [vmem:[#allocation2 + $0x48] sm:$0xff]
    %v33 = vld [vmem:[#allocation2 + $0x50] sm:$0xff]
    %v34 = vld [vmem:[#allocation2 + $0x58] sm:$0xff]
    %v35 = vld [vmem:[#allocation2 + $0x60] sm:$0xff]
    %v36 = vld [vmem:[#allocation2 + $0x68] sm:$0xff]
    %v37 = vld [vmem:[#allocation2 + $0x70] sm:$0xff]
    %v38 = vld [vmem:[#allocation2 + $0x78] sm:$0xff]
    %v39 = vld [vmem:[#allocation2 + $0x80] sm:$0xff]
    %v40 = vld [vmem:[#allocation2 + $0x88] sm:$0xff]
    %v41 = vld [vmem:[#allocation2 + $0x90] sm:$0xff]
    %v42 = vld [vmem:[#allocation2 + $0x98] sm:$0xff]
    %v43 = vld [vmem:[#allocation2 + $0xa0] sm:$0xff]
    %v44 = vld [vmem:[#allocation2 + $0xa8] sm:$0xff]
    %v45 = vld [vmem:[#allocation2 + $0xb0] sm:$0xff]
    %v46 = vld [vmem:[#allocation2 + $0xb8] sm:$0xff]
    %v47 = vld [vmem:[#allocation2 + $0xc0] sm:$0xff]
    %v48 = vld [vmem:[#allocation2 + $0xc8] sm:$0xff]
    %v49 = vld [vmem:[#allocation2 + $0xd0] sm:$0xff]
    %v50 = vld [vmem:[#allocation2 + $0xd8] sm:$0xff]
    %v51 = vld [vmem:[#allocation2 + $0xe0] sm:$0xff]
    %v52 = vld [vmem:[#allocation2 + $0xe8] sm:$0xff]
    %v53 = vld [vmem:[#allocation2 + $0xf0] sm:$0xff]
    %v54 = vld [vmem:[#allocation2 + $0xf8] sm:$0xff]
    %v55 = vld [vmem:[#allocation2 + $0x100] sm:$0xff]
    %v56 = vld [vmem:[#allocation2 + $0x108] sm:$0xff]
    %v57 = vld [vmem:[#allocation2 + $0x110] sm:$0xff]
    %v58 = vld [vmem:[#allocation2 + $0x118] sm:$0xff]
    %v59 = vld [vmem:[#allocation2 + $0x120] sm:$0xff]
    %v60 = vld [vmem:[#allocation2 + $0x128] sm:$0xff]
    %v61 = vld [vmem:[#allocation2 + $0x130] sm:$0xff]
    %v62 = vld [vmem:[#allocation2 + $0x138] sm:$0xff]
    %v63 = vld [vmem:[#allocation2 + $0x140] sm:$0xff]
    %v64 = vld [vmem:[#allocation2 + $0x148] sm:$0xff]
    %v65 = vld [vmem:[#allocation2 + $0x150] sm:$0xff]
    %v66 = vld [vmem:[#allocation2 + $0x158] sm:$0xff]
    %v67 = vld [vmem:[#allocation2 + $0x160] sm:$0xff]
    %v68 = vld [vmem:[#allocation2 + $0x168] sm:$0xff]
    %v69 = vld [vmem:[#allocation2 + $0x170] sm:$0xff]
    %v70 = vld [vmem:[#allocation2 + $0x178] sm:$0xff]
    %v71 = vld [vmem:[#allocation2 + $0x180] sm:$0xff]
    %v72 = vld [vmem:[#allocation2 + $0x188] sm:$0xff]
    %v73 = vld [vmem:[#allocation2 + $0x190] sm:$0xff]
    %v74 = vld [vmem:[#allocation2 + $0x198] sm:$0xff]
    %v75 = vld [vmem:[#allocation2 + $0x1a0] sm:$0xff]
    %v76 = vld [vmem:[#allocation2 + $0x1a8] sm:$0xff]
    %v77 = vld [vmem:[#allocation2 + $0x1b0] sm:$0xff]
    %v78 = vld [vmem:[#allocation2 + $0x1b8] sm:$0xff]
    %v79 = vld [vmem:[#allocation2 + $0x1c0] sm:$0xff]
    %v80 = vld [vmem:[#allocation2 + $0x1c8] sm:$0xff]
    %v81 = vld [vmem:[#allocation2 + $0x1d0] sm:$0xff]
    %v82 = vld [vmem:[#allocation2 + $0x1d8] sm:$0xff]
    %v83 = vld [vmem:[#allocation2 + $0x1e0] sm:$0xff]
    %v84 = vld [vmem:[#allocation2 + $0x1e8] sm:$0xff]
    %v85 = vld [vmem:[#allocation2 + $0x1f0] sm:$0xff]
    %v86 = vld [vmem:[#allocation2 + $0x1f8] sm:$0xff]
    %v87 = vld [vmem:[#allocation2 + $0x200] sm:$0xff]
    %v88 = vld [vmem:[#allocation2 + $0x208] sm:$0xff]
    %v89 = vld [vmem:[#allocation2 + $0x210] sm:$0xff]
    %v90 = vld [vmem:[#allocation2 + $0x218] sm:$0x7]
    %91 = vst [vmem:[#allocation5] sm:$0xff] %v23
    %92 = vst [vmem:[#allocation5 + $0x8] sm:$0xff] %v24
    %93 = vst [vmem:[#allocation5 + $0x10] sm:$0xff] %v25
    %94 = vst [vmem:[#allocation5 + $0x18] sm:$0xff] %v26
    %95 = vst [vmem:[#allocation5 + $0x20] sm:$0xff] %v27
    %96 = vst [vmem:[#allocation5 + $0x28] sm:$0xff] %v28
    %97 = vst [vmem:[#allocation5 + $0x30] sm:$0xff] %v29
    %98 = vst [vmem:[#allocation5 + $0x38] sm:$0xff] %v30
    %99 = vst [vmem:[#allocation5 + $0x40] sm:$0xff] %v31
    %100 = vst [vmem:[#allocation5 + $0x48] sm:$0xff] %v32
    %101 = vst [vmem:[#allocation5 + $0x50] sm:$0xff] %v33
    %102 = vst [vmem:[#allocation5 + $0x58] sm:$0xff] %v34
    %103 = vst [vmem:[#allocation5 + $0x60] sm:$0xff] %v35
    %104 = vst [vmem:[#allocation5 + $0x68] sm:$0xff] %v36
    %105 = vst [vmem:[#allocation5 + $0x70] sm:$0xff] %v37
    %106 = vst [vmem:[#allocation5 + $0x78] sm:$0xff] %v38
    %107 = vst [vmem:[#allocation5 + $0x80] sm:$0xff] %v39
    %108 = vst [vmem:[#allocation5 + $0x88] sm:$0xff] %v40
    %109 = vst [vmem:[#allocation5 + $0x90] sm:$0xff] %v41
    %110 = vst [vmem:[#allocation5 + $0x98] sm:$0xff] %v42
    %111 = vst [vmem:[#allocation5 + $0xa0] sm:$0xff] %v43
    %112 = vst [vmem:[#allocation5 + $0xa8] sm:$0xff] %v44
    %113 = vst [vmem:[#allocation5 + $0xb0] sm:$0xff] %v45
    %114 = vst [vmem:[#allocation5 + $0xb8] sm:$0xff] %v46
    %115 = vst [vmem:[#allocation5 + $0xc0] sm:$0xff] %v47
    %116 = vst [vmem:[#allocation5 + $0xc8] sm:$0xff] %v48
    %117 = vst [vmem:[#allocation5 + $0xd0] sm:$0xff] %v49
    %118 = vst [vmem:[#allocation5 + $0xd8] sm:$0xff] %v50
    %119 = vst [vmem:[#allocation5 + $0xe0] sm:$0xff] %v51
    %120 = vst [vmem:[#allocation5 + $0xe8] sm:$0xff] %v52
    %121 = vst [vmem:[#allocation5 + $0xf0] sm:$0xff] %v53
    %122 = vst [vmem:[#allocation5 + $0xf8] sm:$0xff] %v54
    %123 = vst [vmem:[#allocation5 + $0x100] sm:$0xff] %v55
    %124 = vst [vmem:[#allocation5 + $0x108] sm:$0xff] %v56
    %125 = vst [vmem:[#allocation5 + $0x110] sm:$0xff] %v57
    %126 = vst [vmem:[#allocation5 + $0x118] sm:$0xff] %v58
    %127 = vst [vmem:[#allocation5 + $0x120] sm:$0xff] %v59
    %128 = vst [vmem:[#allocation5 + $0x128] sm:$0xff] %v60
    %129 = vst [vmem:[#allocation5 + $0x130] sm:$0xff] %v61
    %130 = vst [vmem:[#allocation5 + $0x138] sm:$0xff] %v62
    %131 = vst [vmem:[#allocation5 + $0x140] sm:$0xff] %v63
    %132 = vst [vmem:[#allocation5 + $0x148] sm:$0xff] %v64
    %133 = vst [vmem:[#allocation5 + $0x150] sm:$0xff] %v65
    %134 = vst [vmem:[#allocation5 + $0x158] sm:$0xff] %v66
    %135 = vst [vmem:[#allocation5 + $0x160] sm:$0xff] %v67
    %136 = vst [vmem:[#allocation5 + $0x168] sm:$0xff] %v68
    %137 = vst [vmem:[#allocation5 + $0x170] sm:$0xff] %v69
    %138 = vst [vmem:[#allocation5 + $0x178] sm:$0xff] %v70
    %139 = vst [vmem:[#allocation5 + $0x180] sm:$0xff] %v71
    %140 = vst [vmem:[#allocation5 + $0x188] sm:$0xff] %v72
    %141 = vst [vmem:[#allocation5 + $0x190] sm:$0xff] %v73
    %142 = vst [vmem:[#allocation5 + $0x198] sm:$0xff] %v74
    %143 = vst [vmem:[#allocation5 + $0x1a0] sm:$0xff] %v75
    %144 = vst [vmem:[#allocation5 + $0x1a8] sm:$0xff] %v76
    %145 = vst [vmem:[#allocation5 + $0x1b0] sm:$0xff] %v77
    %146 = vst [vmem:[#allocation5 + $0x1b8] sm:$0xff] %v78
    %147 = vst [vmem:[#allocation5 + $0x1c0] sm:$0xff] %v79
    %148 = vst [vmem:[#allocation5 + $0x1c8] sm:$0xff] %v80
    %149 = vst [vmem:[#allocation5 + $0x1d0] sm:$0xff] %v81
    %150 = vst [vmem:[#allocation5 + $0x1d8] sm:$0xff] %v82
    %151 = vst [vmem:[#allocation5 + $0x1e0] sm:$0xff] %v83
    %152 = vst [vmem:[#allocation5 + $0x1e8] sm:$0xff] %v84
    %153 = vst [vmem:[#allocation5 + $0x1f0] sm:$0xff] %v85
    %154 = vst [vmem:[#allocation5 + $0x1f8] sm:$0xff] %v86
    %155 = vst [vmem:[#allocation5 + $0x200] sm:$0xff] %v87
    %156 = vst [vmem:[#allocation5 + $0x208] sm:$0xff] %v88
    %157 = vst [vmem:[#allocation5 + $0x210] sm:$0xff] %v89
    %158 = vst [vmem:[#allocation5 + $0x218] sm:$0x7] %v90
    // Predicated region
    $region10: #{tpu_custom_call.1} parent=1 // pred_check
      _
    $region11: #{tpu_custom_call.1} parent=1 // pred_check_branch
      %160 = sbr.rel (0) target = $region13
    $region12: #{tpu_custom_call.1} parent=1 // pred_region
      %s162 = ssub.s32 8704, 8704
      %163 = vsyncadd [#allocation4], %s162
      %s164 = sshll.u32 [#allocation5], 4
      %s165 = int_to_ptr.vmem [resolvable:$true] %s164
      %170 = dma.vmem_to_hbm [thread:$0]  %s165, 8704, %s1, [#allocation4], 128, 128, 8
    $region13: #{tpu_custom_call.1} parent=1 // pred_fallthru
      _
    // Predicated region
    $region14: #{tpu_custom_call.1} parent=1 // pred_check
      _
    $region15: #{tpu_custom_call.1} parent=1 // pred_check_branch
      %172 = sbr.rel (0) target = $region17
    $region16: #{tpu_custom_call.1} parent=1 // pred_region
      %173 = dma.done [#allocation4], 8704
    $region17: #{tpu_custom_call.1} parent=1 // pred_fallthru
      _
    %174 = vsyncpa [#allocation3], 1
    %175 = vsyncpa [#allocation4], 1

</llo_original>
